<compile_context>
chip_gen: v7x
topology: tpu7x:2x2x1
jax: 0.10.0
libtpu: 0.0.40
codegen_flags: <defaults>
</compile_context>

<pallas_src>
import jax
import jax.numpy as jnp
from jax import lax
from jax.experimental import pallas as pl
from jax.experimental.pallas import tpu as pltpu


def _make_adaptive_fuse_kernel(inv_hw, lane_chunk):
    """Builds the kernel with static scalars (1/HW, lane chunk width) closed over."""

    def kernel(x_ref, w1t_ref, b1_ref, w2t_ref, b2_ref, o_ref):
        # x_ref / o_ref block: (bn, C, HWp)  — bn batch rows, lane-dense spatial.
        # w1t_ref: (C, mid), b1_ref: (1, mid), w2t_ref: (mid, C), b2_ref: (1, C)
        bn, c, hwp = x_ref.shape                 # static block shape
        n_chunks = hwp // lane_chunk

        # --- Global average pool: chunked lane-sum, accumulated in f32. ---
        def gap_body(i, acc):
            start = pl.multiple_of(i * lane_chunk, 128)
            sl = x_ref[:, :, pl.ds(start, lane_chunk)].astype(jnp.float32)
            return acc + jnp.sum(sl, axis=-1)    # (bn, c)

        gap = lax.fori_loop(0, n_chunks, gap_body,
                            jnp.zeros((bn, c), jnp.float32)) * inv_hw

        # --- Squeeze/excite gate, batched over the bn rows of this block. ---
        h = jnp.dot(gap, w1t_ref[...],
                    preferred_element_type=jnp.float32) + b1_ref[...]   # (bn, mid)
        h = jnp.maximum(h, 0.0)
        s = jnp.dot(h, w2t_ref[...],
                    preferred_element_type=jnp.float32) + b2_ref[...]   # (bn, c)
        gate = jax.nn.sigmoid(s)[:, :, None]                            # (bn, c, 1)

        # --- Scale pass: re-read x in lane chunks (cheap VMEM loads), store. ---
        @pl.loop(0, n_chunks)
        def _(i):
            start = pl.multiple_of(i * lane_chunk, 128)
            sl = x_ref[:, :, pl.ds(start, lane_chunk)]
            o_ref[:, :, pl.ds(start, lane_chunk)] = (sl * gate).astype(o_ref.dtype)

    return kernel


def adaptive_fuse(x_nchw, w1, b1, w2, b2, *, block_target_bytes=1 << 20):
    """x_nchw: (N, C, H, W). w1: (mid, C), b1: (mid,), w2: (C, mid), b2: (C,)."""
    N, C, H, W = x_nchw.shape
    mid = w1.shape[0]
    HW = H * W
    HWp = ((HW + 127) // 128) * 128            # lane-dense spatial width

    x_flat = x_nchw.reshape(N, C, HW)
    if HWp != HW:
        # Zero padding does not perturb the GAP because we divide by the true HW.
        x_flat = jnp.pad(x_flat, ((0, 0), (0, 0), (0, HWp - HW)))

    # Transposed weights / 2D biases so the in-kernel dots are row-batched.
    w1t = jnp.asarray(w1).T                    # (C, mid)
    w2t = jnp.asarray(w2).T                    # (mid, C)
    b1_2d = jnp.asarray(b1).reshape(1, mid)
    b2_2d = jnp.asarray(b2).reshape(1, C)

    # Batch tile: aim for ~block_target_bytes per x block, keep >= 2 grid steps
    # (v7x has 2 TensorCores; no-op on v5e/v6e), and require bn | N.
    itemsize = jnp.dtype(x_nchw.dtype).itemsize
    bytes_per_batch = C * HWp * itemsize
    bn = max(1, block_target_bytes // bytes_per_batch)
    bn = min(bn, N)
    if N >= 2:
        bn = min(bn, max(1, N // 2))
    while N % bn:
        bn -= 1
    grid = (N // bn,)

    # Lane chunk for the in-kernel read loops: a multiple of 128 that divides
    # HWp, sized so a chunk slice stays comfortably inside the 64-vreg file.
    elem_budget = 32 * 1024                    # ~32 f32 vregs worth of data
    cap = min(HWp, max(128, (elem_budget // max(1, bn * C)) // 128 * 128))
    lane_chunk = 128
    for cand in range(cap, 127, -128):
        if HWp % cand == 0:
            lane_chunk = cand
            break

    kernel = _make_adaptive_fuse_kernel(1.0 / HW, lane_chunk)

    out_flat = pl.pallas_call(
        kernel,
        out_shape=jax.ShapeDtypeStruct((N, C, HWp), x_nchw.dtype),
        grid_spec=pltpu.PrefetchScalarGridSpec(
            num_scalar_prefetch=0,
            grid=grid,
            in_specs=[
                pl.BlockSpec((bn, C, HWp), lambda n: (n, 0, 0)),   # x (Bn batches)
                pl.BlockSpec((C, mid), lambda n: (0, 0)),          # fc1 weight^T
                pl.BlockSpec((1, mid), lambda n: (0, 0)),          # fc1 bias
                pl.BlockSpec((mid, C), lambda n: (0, 0)),          # fc2 weight^T
                pl.BlockSpec((1, C), lambda n: (0, 0)),            # fc2 bias
            ],
            out_specs=pl.BlockSpec((bn, C, HWp), lambda n: (n, 0, 0)),
        ),
        compiler_params=pltpu.CompilerParams(
            dimension_semantics=("parallel",)),
    )(x_flat, w1t, b1_2d, w2t, b2_2d)

    if HWp != HW:
        out_flat = out_flat[:, :, :HW]
    return out_flat.reshape(N, C, H, W)


def reference_adaptive_fuse(x, w1, b1, w2, b2):
    """Pure-JAX reference mirroring the PyTorch forward (layer_norm=False)."""
    gap = jnp.mean(x, axis=(2, 3))                  # (N, C)
    h = jnp.maximum(gap @ w1.T + b1, 0.0)           # (N, mid)
    s = h @ w2.T + b2                               # (N, C)
    gate = jax.nn.sigmoid(s)[:, :, None, None]      # (N, C, 1, 1)
    return x * gate


if __name__ == "__main__":
    # Small shapes consistent with the module: batch=2, channels=8, 16x16 spatial.
    N, C, H, W = 2, 8, 16, 16
    reduction = 4
    mid = C // reduction

    key = jax.random.PRNGKey(0)
    kx, k1, k2, k3, k4 = jax.random.split(key, 5)

    x = jax.random.normal(kx, (N, C, H, W), dtype=jnp.float32)
    # fc1: Conv2d(C, mid, 1) -> weight (mid, C, 1, 1) squeezed, bias (mid,)
    w1 = jax.random.normal(k1, (mid, C), dtype=jnp.float32) * 0.1
    b1 = jax.random.normal(k2, (mid,), dtype=jnp.float32) * 0.1
    # fc2: Conv2d(mid, C, 1) -> weight (C, mid, 1, 1) squeezed, bias (C,)
    w2 = jax.random.normal(k3, (C, mid), dtype=jnp.float32) * 0.1
    b2 = jax.random.normal(k4, (C,), dtype=jnp.float32) * 0.1

    out = adaptive_fuse(x, w1, b1, w2, b2)
    jax.block_until_ready(out)

    ref = reference_adaptive_fuse(x, w1, b1, w2, b2)
    assert out.shape == x.shape and out.dtype == x.dtype
    assert jnp.allclose(out, ref, atol=1e-5, rtol=1e-5), "mismatch vs reference"

    # Exercise the lane-padding path (7x7=49 spatial, not a multiple of 128).
    x2 = jax.random.normal(kx, (N, C, 7, 7), dtype=jnp.float32)
    out2 = adaptive_fuse(x2, w1, b1, w2, b2)
    jax.block_until_ready(out2)
    ref2 = reference_adaptive_fuse(x2, w1, b1, w2, b2)
    assert jnp.allclose(out2, ref2, atol=1e-5, rtol=1e-5), "mismatch (padded case)"

    print("KERNEL_OK")
</pallas_src>

<mosaic_0001>
module attributes {stable_mosaic.version = 11 : i64} {
  func.func @kernel(%arg0: i32, %arg1: memref<1x8x256xf32, #tpu.memory_space<vmem>>, %arg2: memref<8x2xf32, #tpu.memory_space<vmem>>, %arg3: memref<1x2xf32, #tpu.memory_space<vmem>>, %arg4: memref<2x8xf32, #tpu.memory_space<vmem>>, %arg5: memref<1x8xf32, #tpu.memory_space<vmem>>, %arg6: memref<1x8x256xf32, #tpu.memory_space<vmem>>) attributes {dimension_semantics = [#tpu.dimension_semantics<parallel>], iteration_bounds = array<i64: 2>, scalar_prefetch = 0 : i64, scratch_operands = 0 : i64, tpu.core_type = #tpu.core_type<tc>, window_params = [{transform_indices = @transform_0, window_bounds = array<i64: 1, 8, 256>}, {pipeline_mode = #tpu.pipeline_mode<synchronous>, transform_indices = @transform_1, window_bounds = array<i64: 8, 2>}, {pipeline_mode = #tpu.pipeline_mode<synchronous>, transform_indices = @transform_2, window_bounds = array<i64: 1, 2>}, {pipeline_mode = #tpu.pipeline_mode<synchronous>, transform_indices = @transform_3, window_bounds = array<i64: 2, 8>}, {pipeline_mode = #tpu.pipeline_mode<synchronous>, transform_indices = @transform_4, window_bounds = array<i64: 1, 8>}, {transform_indices = @transform_5, window_bounds = array<i64: 1, 8, 256>}]} {
    %cst = arith.constant 0.000000e+00 : f32
    %0 = vector.broadcast %cst : f32 to vector<1x8xf32>
    %c0_i32 = arith.constant 0 : i32
    %c256_i32 = arith.constant 256 : i32
    %1 = arith.muli %c0_i32, %c256_i32 : i32
    %2 = tpu.assume_multiple %1, 128 : i32
    %c0 = arith.constant 0 : index
    %c0_0 = arith.constant 0 : index
    %3 = arith.index_cast %2 : i32 to index
    %4 = vector.load %arg1[%c0, %c0_0, %3] : memref<1x8x256xf32, #tpu.memory_space<vmem>>, vector<1x8x256xf32>
    %cst_1 = arith.constant dense<0.000000e+00> : vector<1x8xf32>
    %5 = vector.multi_reduction <add>, %4, %cst_1 [2] : vector<1x8x256xf32> to vector<1x8xf32>
    %6 = arith.addf %0, %5 : vector<1x8xf32>
    %c1_i32 = arith.constant 1 : i32
    %cst_2 = arith.constant 3.906250e-03 : f32
    %7 = vector.broadcast %cst_2 : f32 to vector<1x8xf32>
    %8 = arith.mulf %6, %7 : vector<1x8xf32>
    %c0_3 = arith.constant 0 : index
    %c0_4 = arith.constant 0 : index
    %9 = vector.load %arg2[%c0_3, %c0_4] : memref<8x2xf32, #tpu.memory_space<vmem>>, vector<8x2xf32>
    %cst_5 = arith.constant dense<0.000000e+00> : vector<1x2xf32>
    %10 = tpu.matmul %8, %9, %cst_5 {dimension_numbers = #tpu.dot_dimension_numbers<[1], [0], [0], [1], [0, 0, 1, 1], [], []>} : vector<1x8xf32>, vector<8x2xf32>, vector<1x2xf32> -> vector<1x2xf32>
    %c0_6 = arith.constant 0 : index
    %c0_7 = arith.constant 0 : index
    %11 = vector.load %arg3[%c0_6, %c0_7] : memref<1x2xf32, #tpu.memory_space<vmem>>, vector<1x2xf32>
    %12 = arith.addf %10, %11 : vector<1x2xf32>
    %cst_8 = arith.constant 0.000000e+00 : f32
    %13 = vector.broadcast %cst_8 : f32 to vector<1x2xf32>
    %14 = arith.maximumf %12, %13 : vector<1x2xf32>
    %c0_9 = arith.constant 0 : index
    %c0_10 = arith.constant 0 : index
    %15 = vector.load %arg4[%c0_9, %c0_10] : memref<2x8xf32, #tpu.memory_space<vmem>>, vector<2x8xf32>
    %cst_11 = arith.constant dense<0.000000e+00> : vector<1x8xf32>
    %16 = tpu.matmul %14, %15, %cst_11 {dimension_numbers = #tpu.dot_dimension_numbers<[1], [0], [0], [1], [0, 0, 1, 1], [], []>} : vector<1x2xf32>, vector<2x8xf32>, vector<1x8xf32> -> vector<1x8xf32>
    %c0_12 = arith.constant 0 : index
    %c0_13 = arith.constant 0 : index
    %17 = vector.load %arg5[%c0_12, %c0_13] : memref<1x8xf32, #tpu.memory_space<vmem>>, vector<1x8xf32>
    %18 = arith.addf %16, %17 : vector<1x8xf32>
    %19 = arith.negf %18 : vector<1x8xf32>
    %20 = math.exp %19 : vector<1x8xf32>
    %cst_14 = arith.constant 1.000000e+00 : f32
    %21 = vector.broadcast %cst_14 : f32 to vector<1x8xf32>
    %22 = arith.addf %21, %20 : vector<1x8xf32>
    %23 = arith.divf %21, %22 : vector<1x8xf32>
    %24 = vector.shape_cast %23 : vector<1x8xf32> to vector<1x8x1xf32>
    %c0_i32_15 = arith.constant 0 : i32
    %c1_i32_16 = arith.constant 1 : i32
    %25 = arith.muli %c0_i32_15, %c1_i32_16 : i32
    %c0_i32_17 = arith.constant 0 : i32
    %26 = arith.addi %c0_i32_17, %25 : i32
    %c256_i32_18 = arith.constant 256 : i32
    %27 = arith.muli %26, %c256_i32_18 : i32
    %28 = tpu.assume_multiple %27, 128 : i32
    %c0_19 = arith.constant 0 : index
    %c0_20 = arith.constant 0 : index
    %29 = arith.index_cast %28 : i32 to index
    %30 = vector.load %arg1[%c0_19, %c0_20, %29] : memref<1x8x256xf32, #tpu.memory_space<vmem>>, vector<1x8x256xf32>
    %31 = vector.broadcast %24 : vector<1x8x1xf32> to vector<1x8x256xf32>
    %32 = arith.mulf %30, %31 : vector<1x8x256xf32>
    %c0_21 = arith.constant 0 : index
    %c0_22 = arith.constant 0 : index
    %33 = arith.index_cast %28 : i32 to index
    %34 = vector.load %arg6[%c0_21, %c0_22, %33] : memref<1x8x256xf32, #tpu.memory_space<vmem>>, vector<1x8x256xf32>
    tpu.vector_store %arg6[%c0_21, %c0_22, %33], %32 {strides = array<i32>} : memref<1x8x256xf32, #tpu.memory_space<vmem>>, vector<1x8x256xf32>,
    %c1_i32_23 = arith.constant 1 : i32
    return
  }
  func.func @transform_0(%arg0: i32) -> (i32, i32, i32) {
    %c0_i32 = arith.constant 0 : i32
    %c0_i32_0 = arith.constant 0 : i32
    %c0_i32_1 = arith.constant 0 : i32
    return %arg0, %c0_i32, %c0_i32_0 : i32, i32, i32
  }
  func.func @transform_1(%arg0: i32) -> (i32, i32) {
    %c0_i32 = arith.constant 0 : i32
    %c0_i32_0 = arith.constant 0 : i32
    %c0_i32_1 = arith.constant 0 : i32
    return %c0_i32, %c0_i32_0 : i32, i32
  }
  func.func @transform_2(%arg0: i32) -> (i32, i32) {
    %c0_i32 = arith.constant 0 : i32
    %c0_i32_0 = arith.constant 0 : i32
    %c0_i32_1 = arith.constant 0 : i32
    return %c0_i32, %c0_i32_0 : i32, i32
  }
  func.func @transform_3(%arg0: i32) -> (i32, i32) {
    %c0_i32 = arith.constant 0 : i32
    %c0_i32_0 = arith.constant 0 : i32
    %c0_i32_1 = arith.constant 0 : i32
    return %c0_i32, %c0_i32_0 : i32, i32
  }
  func.func @transform_4(%arg0: i32) -> (i32, i32) {
    %c0_i32 = arith.constant 0 : i32
    %c0_i32_0 = arith.constant 0 : i32
    %c0_i32_1 = arith.constant 0 : i32
    return %c0_i32, %c0_i32_0 : i32, i32
  }
  func.func @transform_5(%arg0: i32) -> (i32, i32, i32) {
    %c0_i32 = arith.constant 0 : i32
    %c0_i32_0 = arith.constant 0 : i32
    %c0_i32_1 = arith.constant 0 : i32
    return %arg0, %c0_i32, %c0_i32_0 : i32, i32, i32
  }
}

</mosaic_0001>

<llo_original>
// kernel: tpu_custom_call.1
$region0: #{tpu_custom_call.1}
  #allocation0 [shape = 'u32[]', space=smem, size = 0x4, offset = 0x4, fixed_abs, tag = 'smem constant byte address 0x4 - core index']
  #allocation1 [shape = 'u32[144,128]{1,0:T(1,128)}', space=vmem, size = 0x12000, scoped, tag = 'internal scratch']
  %s0 = inlined_call_operand.hbm [shape: f32[2,8,256], index: 0, kind: input, shape index: {}]
  %s1 = inlined_call_operand.vmem [shape: f32[8,2], index: 1, kind: input, shape index: {}]
  %s2 = inlined_call_operand.vmem [shape: f32[1,2], index: 2, kind: input, shape index: {}]
  %s3 = inlined_call_operand.vmem [shape: f32[2,8], index: 3, kind: input, shape index: {}]
  %s4 = inlined_call_operand.vmem [shape: f32[1,8], index: 4, kind: input, shape index: {}]
  %s5 = inlined_call_operand.hbm [shape: f32[2,8,256], index: 5, kind: output, shape index: {}]
  %s6 = sld [smem:[#allocation0]]
  $region57: #{tpu_custom_call.1} parent=0
    _
  %s8 = ssub.s32 1, %s6
  %s9 = scalar_select 0, %s8, %s6
  $region1: #{tpu_custom_call.1} parent=0
    #allocation2 [shape = 'u8[16384]{0}', space=vmem, size = 0x4000, scoped, tag = 'input window, operand 0']
    #allocation3 [shape = 's32[2]{0}', space=sflag, size = 0x8, scoped, tag = 'scoped memory for tpu_custom_call.1']
    #allocation4 [shape = 's32[2]{0}', space=sflag, size = 0x8, scoped, tag = 'scoped memory for tpu_custom_call.1']
    #allocation5 [shape = 'u8[16384]{0}', space=vmem, size = 0x4000, scoped, tag = 'output window, operand 0']
    %10 = vsyncpa [#allocation3], 0
    %s11 = scalar_lea.sflag [#allocation3], 1
    %12 = vsyncpa %s11, 0
    %13 = vsyncpa [#allocation4], 0
    %s14 = scalar_lea.sflag [#allocation4], 1
    %15 = vsyncpa %s14, 0
    loop: start=0, step=1, limit=4
    $region2: #{tpu_custom_call.1} parent=1 // loop_pre_header
      _
    $region3: #{tpu_custom_call.1} parent=1 // loop_header
      %s17 = sphi 0, %s21
      %p18 = scmp.ge.s32.totalorder %s17, 4
      %s27 = sphi 0, %s29
      %s30 = sphi 0, %s27
      %s31 = sphi 0, %s30
      %s47 = sphi 0, %s31
      %s51 = sphi 0, %s51
      %s53 = sphi 0, %s51
      %s54 = sphi 0, %s53
      %s68 = sphi 0, %s54
      %s72 = sphi 0, %s72
      %s74 = sphi 0, %s72
      %s75 = sphi 0, %s74
      %s89 = sphi 0, %s75
      %s93 = sphi 0, %s93
      %s95 = sphi 0, %s93
      %s96 = sphi 0, %s95
      %s110 = sphi 0, %s96
      %s114 = sphi 0, %s114
      %s116 = sphi 0, %s114
      %s117 = sphi 0, %s116
      %s131 = sphi 0, %s117
      %s137 = sphi 0, %s139
      %s140 = sphi 0, %s137
      %s141 = sphi 0, %s140
      %s157 = sphi 0, %s141
    $region4: #{tpu_custom_call.1} parent=1 // loop_header_branch
      %20 = sbr.rel (%p18) target = $region8
    $region5: #{tpu_custom_call.1} parent=1 // loop_body
      %s22 = ssub.s32 %s17, 1
      %s23 = ssub.s32 %s17, 2
      %s24 = sadd.s32 %s17, 1
      %s25 = ssub.s32 %s17, %s24
      %p26 = scmp.eq.s32.totalorder %s25, 0
      %s28 = sadd.s32 %s27, 1
      %s29 = scalar_select %p26, %s27, %s28
      %p32 = pneg %p26
      %p33 = scmp.eq.s32.totalorder %s17, 1
      %p34 = por %p32, %p33
      %p35 = scmp.ne.s32.totalorder %s27, %s30
      %p36 = scmp.eq.s32.totalorder %s17, 0
      %p37 = por %p35, %p36
      %p38 = scmp.ne.s32.totalorder %s27, %s30
      %p39 = scmp.eq.s32.totalorder %s22, 1
      %p40 = por %p38, %p39
      %p41 = scmp.ne.s32.totalorder %s30, %s31
      %p42 = scmp.eq.s32.totalorder %s22, 0
      %p43 = por %p41, %p42
      %p44 = scmp.ne.s32.totalorder %s30, %s31
      %p45 = scmp.eq.s32.totalorder %s23, 1
      %p46 = por %p44, %p45
      %p48 = scmp.ne.s32.totalorder %s31, %s47
      %p49 = scmp.eq.s32.totalorder %s23, 0
      %p50 = por %p48, %p49
      %s52 = sadd.s32 %s51, 1
      %p55 = scmp.eq.s32.totalorder %s17, 1
      %p56 = scmp.ne.s32.totalorder %s51, %s53
      %p57 = scmp.eq.s32.totalorder %s17, 0
      %p58 = por %p56, %p57
      %p59 = scmp.ne.s32.totalorder %s51, %s53
      %p60 = scmp.eq.s32.totalorder %s22, 1
      %p61 = por %p59, %p60
      %p62 = scmp.ne.s32.totalorder %s53, %s54
      %p63 = scmp.eq.s32.totalorder %s22, 0
      %p64 = por %p62, %p63
      %p65 = scmp.ne.s32.totalorder %s53, %s54
      %p66 = scmp.eq.s32.totalorder %s23, 1
      %p67 = por %p65, %p66
      %p69 = scmp.ne.s32.totalorder %s54, %s68
      %p70 = scmp.eq.s32.totalorder %s23, 0
      %p71 = por %p69, %p70
      %s73 = sadd.s32 %s72, 1
      %p76 = scmp.eq.s32.totalorder %s17, 1
      %p77 = scmp.ne.s32.totalorder %s72, %s74
      %p78 = scmp.eq.s32.totalorder %s17, 0
      %p79 = por %p77, %p78
      %p80 = scmp.ne.s32.totalorder %s72, %s74
      %p81 = scmp.eq.s32.totalorder %s22, 1
      %p82 = por %p80, %p81
      %p83 = scmp.ne.s32.totalorder %s74, %s75
      %p84 = scmp.eq.s32.totalorder %s22, 0
      %p85 = por %p83, %p84
      %p86 = scmp.ne.s32.totalorder %s74, %s75
      %p87 = scmp.eq.s32.totalorder %s23, 1
      %p88 = por %p86, %p87
      %p90 = scmp.ne.s32.totalorder %s75, %s89
      %p91 = scmp.eq.s32.totalorder %s23, 0
      %p92 = por %p90, %p91
      %s94 = sadd.s32 %s93, 1
      %p97 = scmp.eq.s32.totalorder %s17, 1
      %p98 = scmp.ne.s32.totalorder %s93, %s95
      %p99 = scmp.eq.s32.totalorder %s17, 0
      %p100 = por %p98, %p99
      %p101 = scmp.ne.s32.totalorder %s93, %s95
      %p102 = scmp.eq.s32.totalorder %s22, 1
      %p103 = por %p101, %p102
      %p104 = scmp.ne.s32.totalorder %s95, %s96
      %p105 = scmp.eq.s32.totalorder %s22, 0
      %p106 = por %p104, %p105
      %p107 = scmp.ne.s32.totalorder %s95, %s96
      %p108 = scmp.eq.s32.totalorder %s23, 1
      %p109 = por %p107, %p108
      %p111 = scmp.ne.s32.totalorder %s96, %s110
      %p112 = scmp.eq.s32.totalorder %s23, 0
      %p113 = por %p111, %p112
      %s115 = sadd.s32 %s114, 1
      %p118 = scmp.eq.s32.totalorder %s17, 1
      %p119 = scmp.ne.s32.totalorder %s114, %s116
      %p120 = scmp.eq.s32.totalorder %s17, 0
      %p121 = por %p119, %p120
      %p122 = scmp.ne.s32.totalorder %s114, %s116
      %p123 = scmp.eq.s32.totalorder %s22, 1
      %p124 = por %p122, %p123
      %p125 = scmp.ne.s32.totalorder %s116, %s117
      %p126 = scmp.eq.s32.totalorder %s22, 0
      %p127 = por %p125, %p126
      %p128 = scmp.ne.s32.totalorder %s116, %s117
      %p129 = scmp.eq.s32.totalorder %s23, 1
      %p130 = por %p128, %p129
      %p132 = scmp.ne.s32.totalorder %s117, %s131
      %p133 = scmp.eq.s32.totalorder %s23, 0
      %p134 = por %p132, %p133
      %s135 = ssub.s32 %s17, %s24
      %p136 = scmp.eq.s32.totalorder %s135, 0
      %s138 = sadd.s32 %s137, 1
      %s139 = scalar_select %p136, %s137, %s138
      %p142 = pneg %p136
      %p143 = scmp.eq.s32.totalorder %s17, 1
      %p144 = por %p142, %p143
      %p145 = scmp.ne.s32.totalorder %s137, %s140
      %p146 = scmp.eq.s32.totalorder %s17, 0
      %p147 = por %p145, %p146
      %p148 = scmp.ne.s32.totalorder %s137, %s140
      %p149 = scmp.eq.s32.totalorder %s22, 1
      %p150 = por %p148, %p149
      %p151 = scmp.ne.s32.totalorder %s140, %s141
      %p152 = scmp.eq.s32.totalorder %s22, 0
      %p153 = por %p151, %p152
      %p154 = scmp.ne.s32.totalorder %s140, %s141
      %p155 = scmp.eq.s32.totalorder %s23, 1
      %p156 = por %p154, %p155
      %p158 = scmp.ne.s32.totalorder %s141, %s157
      %p159 = scmp.eq.s32.totalorder %s23, 0
      %p160 = por %p158, %p159
      %p161 = scmp.le.s32.totalorder 1, %s17
      %p162 = scmp.lt.s32.totalorder %s17, 3
      %p163 = pnand %p161, %p162
      %p164 = pneg %p163
      // Predicated region
      $region9: #{tpu_custom_call.1} parent=5 // pred_check
        _
      $region10: #{tpu_custom_call.1} parent=5 // pred_check_branch
        %166 = sbr.rel (%p163) target = $region12
      $region11: #{tpu_custom_call.1} parent=5 // pred_region
        %s167 = ssub.s32 %s17, 1
        // Predicated region
        $region13: #{tpu_custom_call.1} parent=11 // pred_check
          %p168 = pneg %p64
        $region14: #{tpu_custom_call.1} parent=11 // pred_check_branch
          %170 = sbr.rel (%p168) target = $region16
        $region15: #{tpu_custom_call.1} parent=11 // pred_region
          _
        $region16: #{tpu_custom_call.1} parent=11 // pred_fallthru
          _
        // Predicated region
        $region17: #{tpu_custom_call.1} parent=11 // pred_check
          %p171 = pneg %p85
        $region18: #{tpu_custom_call.1} parent=11 // pred_check_branch
          %173 = sbr.rel (%p171) target = $region20
        $region19: #{tpu_custom_call.1} parent=11 // pred_region
          _
        $region20: #{tpu_custom_call.1} parent=11 // pred_fallthru
          _
        // Predicated region
        $region21: #{tpu_custom_call.1} parent=11 // pred_check
          %p174 = pneg %p106
        $region22: #{tpu_custom_call.1} parent=11 // pred_check_branch
          %176 = sbr.rel (%p174) target = $region24
        $region23: #{tpu_custom_call.1} parent=11 // pred_region
          _
        $region24: #{tpu_custom_call.1} parent=11 // pred_fallthru
          _
        // Predicated region
        $region25: #{tpu_custom_call.1} parent=11 // pred_check
          %p177 = pneg %p127
        $region26: #{tpu_custom_call.1} parent=11 // pred_check_branch
          %179 = sbr.rel (%p177) target = $region28
        $region27: #{tpu_custom_call.1} parent=11 // pred_region
          _
        $region28: #{tpu_custom_call.1} parent=11 // pred_fallthru
          _
      $region12: #{tpu_custom_call.1} parent=5 // pred_fallthru
        _
      %p180 = scmp.lt.s32.totalorder %s17, 2
      // Predicated region
      $region29: #{tpu_custom_call.1} parent=5 // pred_check
        %p181 = pneg %p180
      $region30: #{tpu_custom_call.1} parent=5 // pred_check_branch
        %183 = sbr.rel (%p181) target = $region32
      $region31: #{tpu_custom_call.1} parent=5 // pred_region
        // Predicated region
        $region33: #{tpu_custom_call.1} parent=31 // pred_check
          %p184 = pneg %p37
        $region34: #{tpu_custom_call.1} parent=31 // pred_check_branch
          %186 = sbr.rel (%p184) target = $region36
        $region35: #{tpu_custom_call.1} parent=31 // pred_region
          %s187 = sand.u32 %s27, 1
          %s188 = scalar_lea.sflag [#allocation3], %s187
          %s189 = sand.u32 %s27, 1
          %s190 = smul.addr %s189, 16
          %s191 = scalar_lea.vmem [#allocation2], %s190
          %s193 = ssub.s32 256, 256
          %194 = vsyncadd %s188, %s193
          %s195 = smul.addr %s17, 2
          %s196 = smul.addr %s195, 128
          %s197 = scalar_lea.hbm %s0, %s196
          %s199 = sshll.u32 %s191, 4
          %s200 = int_to_ptr.vmem [resolvable:$true] %s199
          %202 = dma.hbm_to_vmem [thread:$0]  %s197, 256, %s200, %s188
        $region36: #{tpu_custom_call.1} parent=31 // pred_fallthru
          _
      $region32: #{tpu_custom_call.1} parent=5 // pred_fallthru
        _
      %p203 = scmp.le.s32.totalorder 1, %s17
      %p204 = scmp.lt.s32.totalorder %s17, 3
      %p205 = pnand %p203, %p204
      %p206 = pneg %p205
      // Predicated region
      $region37: #{tpu_custom_call.1} parent=5 // pred_check
        _
      $region38: #{tpu_custom_call.1} parent=5 // pred_check_branch
        %208 = sbr.rel (%p205) target = $region40
      $region39: #{tpu_custom_call.1} parent=5 // pred_region
        %s209 = ssub.s32 %s17, 1
        %s210 = sand.u32 %s30, 1
        %s211 = scalar_lea.sflag [#allocation3], %s210
        %s212 = sand.u32 %s30, 1
        %s213 = smul.addr %s212, 16
        %s214 = scalar_lea.vmem [#allocation2], %s213
        // Predicated region
        $region41: #{tpu_custom_call.1} parent=39 // pred_check
          %p215 = pneg %p43
        $region42: #{tpu_custom_call.1} parent=39 // pred_check_branch
          %217 = sbr.rel (%p215) target = $region44
        $region43: #{tpu_custom_call.1} parent=39 // pred_region
          %218 = dma.done %s211, 256
        $region44: #{tpu_custom_call.1} parent=39 // pred_fallthru
          _
        %s219 = sand.u32 %s30, 1
        %s220 = scalar_lea.sflag [#allocation3], %s219
        %s221 = sand.u32 %s30, 1
        %s222 = smul.addr %s221, 16
        %s223 = scalar_lea.vmem [#allocation2], %s222
        %p224 = pneg %p43
        %p225 = pneg %p40
        %p226 = pneg %p64
        %p227 = pneg %p61
        %p228 = pneg %p85
        %p229 = pneg %p82
        %p230 = pneg %p106
        %p231 = pneg %p103
        %p232 = pneg %p127
        %p233 = pneg %p124
        %p234 = pneg %p153
        %p235 = pneg %p150
        %s236 = sand.u32 %s140, 1
        %s237 = scalar_lea.sflag [#allocation4], %s236
        %s238 = sand.u32 %s140, 1
        %s239 = smul.addr %s238, 16
        %s240 = scalar_lea.vmem [#allocation5], %s239
        %v241 = vld [vmem:[%s214] sm:$0xff]
        %v242 = vld [vmem:[%s214 + $0x8] sm:$0xff]
        %v243 = vadd.f32 %v241, %v242
        %244 = vadd.xlane.f32.xlu0 %v243
        %v245 = vpop.xlane.xlu0 %244
        %v246 = vadd.f32 %v245, 0.0
        %v247 = vmul.f32 %v246, 0.00390625
        %v248 = vld [vmem:[%s1] sm:$0xff]
        %v249 = vld [vmem:[%s2] sm:$0x1]
        %v251 = vlaneseq
        %v252 = vand.u32 %v251, 127
        %v253 = vlaneseq
        %v254 = vshrl.u32 %v253, 7
        %v255 = vsub.s32 %v252, %v254
        %v256 = vrot.slane %v247, %v255
        %vm257 = vcmask 64512
        %v258 = vsel %vm257, %v256, 0
        %260 = vmatprep.subr.mxu0 0.0
        %261 = vmatpush1.msra.mxu0 %v248
        %262 = vmatprep.subr.mxu0 0.0
        %263 = vmatpush1.msra.mxu0 0.0
        %264 = vmatprep.subr.mxu0 0.0
        %265 = vmatpush1.msra.mxu0 0.0
        %266 = vmatprep.subr.mxu0 0.0
        %267 = vmatpush1.msra.mxu0 0.0
        %268 = vmatprep.subr.mxu0 0.0
        %269 = vmatpush1.msra.mxu0 0.0
        %270 = vmatprep.subr.mxu0 0.0
        %271 = vmatpush1.msra.mxu0 0.0
        %272 = vmatprep.subr.mxu0 0.0
        %273 = vmatpush1.msra.mxu0 0.0
        %274 = vmatprep.subr.mxu0 0.0
        %275 = vmatpush1.msra.mxu0 0.0
        %276 = vmatprep.subr.mxu0 0.0
        %277 = vmatpush1.msra.mxu0 0.0
        %278 = vmatprep.subr.mxu0 0.0
        %279 = vmatpush1.msra.mxu0 0.0
        %280 = vmatprep.subr.mxu0 0.0
        %281 = vmatpush1.msra.mxu0 0.0
        %282 = vmatprep.subr.mxu0 0.0
        %283 = vmatpush1.msra.mxu0 0.0
        %284 = vmatprep.subr.mxu0 0.0
        %285 = vmatpush1.msra.mxu0 0.0
        %286 = vmatprep.subr.mxu0 0.0
        %287 = vmatpush1.msra.mxu0 0.0
        %288 = vmatprep.subr.mxu0 0.0
        %289 = vmatpush1.msra.mxu0 0.0
        %290 = vmatprep.subr.mxu0 0.0
        %291 = vmatpush1.msra.mxu0 0.0
        %292 = vmatprep.subr.mxu0 0.0
        %293 = vmatpush1.msra.mxu0 0.0
        %294 = vmatprep.subr.mxu0 0.0
        %295 = vmatpush1.msra.mxu0 0.0
        %296 = vmatprep.subr.mxu0 0.0
        %297 = vmatpush1.msra.mxu0 0.0
        %298 = vmatprep.subr.mxu0 0.0
        %299 = vmatpush1.msra.mxu0 0.0
        %300 = vmatprep.subr.mxu0 0.0
        %301 = vmatpush1.msra.mxu0 0.0
        %302 = vmatprep.subr.mxu0 0.0
        %303 = vmatpush1.msra.mxu0 0.0
        %304 = vmatprep.subr.mxu0 0.0
        %305 = vmatpush1.msra.mxu0 0.0
        %306 = vmatprep.subr.mxu0 0.0
        %307 = vmatpush1.msra.mxu0 0.0
        %308 = vmatprep.subr.mxu0 0.0
        %309 = vmatpush1.msra.mxu0 0.0
        %310 = vmatprep.subr.mxu0 0.0
        %311 = vmatpush1.msra.mxu0 0.0
        %312 = vmatprep.subr.mxu0 0.0
        %313 = vmatpush1.msra.mxu0 0.0
        %314 = vmatprep.subr.mxu0 0.0
        %315 = vmatpush1.msra.mxu0 0.0
        %316 = vmatprep.subr.mxu0 0.0
        %317 = vmatpush1.msra.mxu0 0.0
        %318 = vmatprep.subr.mxu0 0.0
        %319 = vmatpush1.msra.mxu0 0.0
        %320 = vmatprep.subr.mxu0 0.0
        %321 = vmatpush1.msra.mxu0 0.0
        %322 = vmatprep.subr.mxu0 0.0
        %323 = vmatpush1.msra.mxu0 0.0
        %324 = vmatprep.mubr.f32.mxu0 0.0
        %325 = vmatmul.mubr.f32.gmra.mrb[0].mxu0 %v258
        %v326 = vpop.f32.mrb[0].mxu0
        %v327 = vadd.f32 %v249, %v326
        %v328 = vpop.f32.mrb[0].mxu0
        %329 = vdwg.mxu0
        %v330 = vmax.f32 %v327, 0.0
        %v331 = vld [vmem:[%s3] sm:$0x3]
        %v332 = vld [vmem:[%s4] sm:$0x1]
        %vm333 = vcmask 15360
        %v335 = vsel %vm333, %v330, 0
        %vm337 = vcmask 1041408
        %v339 = vsel %vm337, %v331, 0
        %341 = vmatprep.subr.mxu0 0.0
        %342 = vmatpush1.msra.mxu0 %v339
        %343 = vmatprep.subr.mxu0 0.0
        %344 = vmatpush1.msra.mxu0 0.0
        %345 = vmatprep.subr.mxu0 0.0
        %346 = vmatpush1.msra.mxu0 0.0
        %347 = vmatprep.subr.mxu0 0.0
        %348 = vmatpush1.msra.mxu0 0.0
        %349 = vmatprep.subr.mxu0 0.0
        %350 = vmatpush1.msra.mxu0 0.0
        %351 = vmatprep.subr.mxu0 0.0
        %352 = vmatpush1.msra.mxu0 0.0
        %353 = vmatprep.subr.mxu0 0.0
        %354 = vmatpush1.msra.mxu0 0.0
        %355 = vmatprep.subr.mxu0 0.0
        %356 = vmatpush1.msra.mxu0 0.0
        %357 = vmatprep.subr.mxu0 0.0
        %358 = vmatpush1.msra.mxu0 0.0
        %359 = vmatprep.subr.mxu0 0.0
        %360 = vmatpush1.msra.mxu0 0.0
        %361 = vmatprep.subr.mxu0 0.0
        %362 = vmatpush1.msra.mxu0 0.0
        %363 = vmatprep.subr.mxu0 0.0
        %364 = vmatpush1.msra.mxu0 0.0
        %365 = vmatprep.subr.mxu0 0.0
        %366 = vmatpush1.msra.mxu0 0.0
        %367 = vmatprep.subr.mxu0 0.0
        %368 = vmatpush1.msra.mxu0 0.0
        %369 = vmatprep.subr.mxu0 0.0
        %370 = vmatpush1.msra.mxu0 0.0
        %371 = vmatprep.subr.mxu0 0.0
        %372 = vmatpush1.msra.mxu0 0.0
        %373 = vmatprep.subr.mxu0 0.0
        %374 = vmatpush1.msra.mxu0 0.0
        %375 = vmatprep.subr.mxu0 0.0
        %376 = vmatpush1.msra.mxu0 0.0
        %377 = vmatprep.subr.mxu0 0.0
        %378 = vmatpush1.msra.mxu0 0.0
        %379 = vmatprep.subr.mxu0 0.0
        %380 = vmatpush1.msra.mxu0 0.0
        %381 = vmatprep.subr.mxu0 0.0
        %382 = vmatpush1.msra.mxu0 0.0
        %383 = vmatprep.subr.mxu0 0.0
        %384 = vmatpush1.msra.mxu0 0.0
        %385 = vmatprep.subr.mxu0 0.0
        %386 = vmatpush1.msra.mxu0 0.0
        %387 = vmatprep.subr.mxu0 0.0
        %388 = vmatpush1.msra.mxu0 0.0
        %389 = vmatprep.subr.mxu0 0.0
        %390 = vmatpush1.msra.mxu0 0.0
        %391 = vmatprep.subr.mxu0 0.0
        %392 = vmatpush1.msra.mxu0 0.0
        %393 = vmatprep.subr.mxu0 0.0
        %394 = vmatpush1.msra.mxu0 0.0
        %395 = vmatprep.subr.mxu0 0.0
        %396 = vmatpush1.msra.mxu0 0.0
        %397 = vmatprep.subr.mxu0 0.0
        %398 = vmatpush1.msra.mxu0 0.0
        %399 = vmatprep.subr.mxu0 0.0
        %400 = vmatpush1.msra.mxu0 0.0
        %401 = vmatprep.subr.mxu0 0.0
        %402 = vmatpush1.msra.mxu0 0.0
        %403 = vmatprep.subr.mxu0 0.0
        %404 = vmatpush1.msra.mxu0 0.0
        %405 = vmatprep.mubr.f32.mxu0 0.0
        %406 = vmatmul.mubr.f32.gmra.mrb[0].mxu0 %v335
        %v407 = vpop.f32.mrb[0].mxu0
        %v408 = vadd.f32 %v332, %v407
        %v409 = vpop.f32.mrb[0].mxu0
        %410 = vdwg.mxu0
        %v411 = vxor.u32 %v408, 2147483648
        %v412 = vmul.f32 %v411, 1.442695
        %v413 = vpow.pop %v412
        %v414 = vadd.f32 %v413, 1.0
        %v415 = vrcp.pop %v414
        %v416 = vmul.f32 1.0, %v415
        %v417 = vlaneseq
        %v418 = vshrl.u32 %v417, 7
        %v419 = vsub.s32 0, %v418
        %v420 = vrot.slane %v416, %v419
        %422 = vbcast.lane.b32.xlu0 %v420, 256
        %v423 = vpop.permute.xlu0 %422
        %v424 = vmul.f32 %v241, %v423
        %v425 = vmul.f32 %v242, %v423
        %426 = vst [vmem:[%s240] sm:$0xff] %v424
        %427 = vst [vmem:[%s240 + $0x8] sm:$0xff] %v425
        %s428 = sand.u32 %s140, 1
        %s429 = scalar_lea.sflag [#allocation4], %s428
        %s430 = sand.u32 %s140, 1
        %s431 = smul.addr %s430, 16
        %s432 = scalar_lea.vmem [#allocation5], %s431
        // Predicated region
        $region45: #{tpu_custom_call.1} parent=39 // pred_check
          %p433 = pneg %p150
        $region46: #{tpu_custom_call.1} parent=39 // pred_check_branch
          %435 = sbr.rel (%p433) target = $region48
        $region47: #{tpu_custom_call.1} parent=39 // pred_region
          %s437 = ssub.s32 256, 256
          %438 = vsyncadd %s429, %s437
          %s439 = smul.addr %s22, 2
          %s440 = smul.addr %s439, 128
          %s441 = scalar_lea.hbm %s5, %s440
          %s443 = sshll.u32 %s432, 4
          %s444 = int_to_ptr.vmem [resolvable:$true] %s443
          %446 = dma.vmem_to_hbm [thread:$0]  %s444, 256, %s441, %s429
        $region48: #{tpu_custom_call.1} parent=39 // pred_fallthru
          _
      $region40: #{tpu_custom_call.1} parent=5 // pred_fallthru
        _
      %p447 = scmp.le.s32.totalorder 2, %s17
      // Predicated region
      $region49: #{tpu_custom_call.1} parent=5 // pred_check
        %p448 = pneg %p447
      $region50: #{tpu_custom_call.1} parent=5 // pred_check_branch
        %450 = sbr.rel (%p448) target = $region52
      $region51: #{tpu_custom_call.1} parent=5 // pred_region
        %s451 = ssub.s32 %s17, 2
        // Predicated region
        $region53: #{tpu_custom_call.1} parent=51 // pred_check
          %p452 = pneg %p156
        $region54: #{tpu_custom_call.1} parent=51 // pred_check_branch
          %454 = sbr.rel (%p452) target = $region56
        $region55: #{tpu_custom_call.1} parent=51 // pred_region
          %s455 = sand.u32 %s141, 1
          %s456 = scalar_lea.sflag [#allocation4], %s455
          %s457 = sand.u32 %s141, 1
          %s458 = smul.addr %s457, 16
          %s459 = scalar_lea.vmem [#allocation5], %s458
          %460 = dma.done %s456, 256
        $region56: #{tpu_custom_call.1} parent=51 // pred_fallthru
          _
      $region52: #{tpu_custom_call.1} parent=5 // pred_fallthru
        _
    $region6: #{tpu_custom_call.1} parent=1 // loop_footer
      %s21 = sadd.s32 1, %s17
    $region7: #{tpu_custom_call.1} parent=1 // loop_footer_branch
      %16 = sbr.rel target = $region3
    $region8: #{tpu_custom_call.1} parent=1 // loop_exit
      _
    %461 = vsyncpa [#allocation3], 1
    %s462 = scalar_lea.sflag [#allocation3], 1
    %463 = vsyncpa %s462, 1
    %464 = vsyncpa [#allocation4], 1
    %s465 = scalar_lea.sflag [#allocation4], 1
    %466 = vsyncpa %s465, 1

</llo_original>
